<compile_context>
chip_gen: v7x
topology: tpu7x:2x2x1
jax: 0.10.0
libtpu: 0.0.40
codegen_flags: <defaults>
</compile_context>

<pallas_src>
import jax
import jax.numpy as jnp
from jax.experimental import pallas as pl
from jax.experimental.pallas import tpu as pltpu


def _round_up(x, m):
    return (x + m - 1) // m * m


def siren_kernel(x_ref, w_ref, b_ref, o_ref):
    # x_ref: (tm, in_features), w_ref: (in_features, out_pad),
    # b_ref: (1, out_pad),      o_ref: (tm, out_pad)
    # omega_0 is already folded into w_ref / b_ref by the wrapper.
    z = jnp.dot(x_ref[...], w_ref[...], preferred_element_type=jnp.float32)
    o_ref[...] = jnp.sin(z + b_ref[...]).astype(o_ref.dtype)


def siren_layer(x, w, b, omega_0=30.0, *, tm=1024):
    """x: (N, in_features) f32; w: (out_features, in_features); b: (out_features,)."""
    n, in_features = x.shape
    out_features = w.shape[0]

    # Fold omega_0 into the parameters once (scaled per call here; in a real
    # network this would be done at parameter-init time).
    omega = jnp.float32(omega_0)
    w_t = (omega * w.T).astype(jnp.float32)                 # (in, out) for the MXU
    b2 = (omega * b).reshape(1, out_features).astype(jnp.float32)

    # Lane-dense output: pad out_features up to a multiple of 128 lanes.
    out_pad = _round_up(out_features, 128)
    if out_pad != out_features:
        w_t = jnp.pad(w_t, ((0, 0), (0, out_pad - out_features)))
        b2 = jnp.pad(b2, ((0, 0), (0, out_pad - out_features)))

    # Row tile: big (amortize per-step overhead) but no bigger than the
    # 8-aligned batch; pad N so the grid divides evenly.
    tm = max(8, min(tm, _round_up(n, 8)))
    n_pad = _round_up(n, tm)
    x_p = jnp.pad(x, ((0, n_pad - n), (0, 0))) if n_pad != n else x

    grid = (n_pad // tm,)

    # VMEM budget: double-buffered x and out tiles + resident W^T + bias.
    vmem_bytes = 4 * (2 * tm * in_features + 2 * tm * out_pad
                      + in_features * out_pad + out_pad) + (2 << 20)
    vmem_bytes = int(min(max(vmem_bytes, 16 << 20), 64 << 20))

    cost = pl.CostEstimate(
        flops=2 * n_pad * in_features * out_pad,
        transcendentals=n_pad * out_pad,
        bytes_accessed=4 * (n_pad * in_features + in_features * out_pad
                            + n_pad * out_pad),
    )

    y = pl.pallas_call(
        siren_kernel,
        out_shape=jax.ShapeDtypeStruct((n_pad, out_pad), jnp.float32),
        grid_spec=pltpu.PrefetchScalarGridSpec(
            num_scalar_prefetch=0,
            grid=grid,
            in_specs=[
                pl.BlockSpec((tm, in_features), lambda i: (i, 0)),       # x tile
                pl.BlockSpec((in_features, out_pad), lambda i: (0, 0)),  # full W^T
                pl.BlockSpec((1, out_pad), lambda i: (0, 0)),            # bias
            ],
            out_specs=pl.BlockSpec((tm, out_pad), lambda i: (i, 0)),
        ),
        compiler_params=pltpu.CompilerParams(
            dimension_semantics=("parallel",),
            vmem_limit_bytes=vmem_bytes,
        ),
        cost_estimate=cost,
    )(x_p, w_t, b2)

    return y[:n, :out_features]


def init_siren_params(key, in_features, out_features, omega_0=30.0, is_first=False):
    """Deterministic SIREN init matching the PyTorch module's init_weights."""
    kw, kb = jax.random.split(key)
    if is_first:
        bound_w = 1.0 / in_features
    else:
        bound_w = float(jnp.sqrt(6.0 / in_features)) / omega_0
    w = jax.random.uniform(kw, (out_features, in_features), jnp.float32,
                           minval=-bound_w, maxval=bound_w)
    # nn.Linear default bias init: U(-1/sqrt(in_features), 1/sqrt(in_features))
    bound_b = 1.0 / float(jnp.sqrt(jnp.float32(in_features)))
    b = jax.random.uniform(kb, (out_features,), jnp.float32,
                           minval=-bound_b, maxval=bound_b)
    return w, b


if __name__ == "__main__":
    key = jax.random.PRNGKey(0)
    kx, kp = jax.random.split(key)

    in_features, out_features = 16, 32
    n = 64                      # small batch of coordinates
    omega_0 = 30.0

    x = jax.random.normal(kx, (n, in_features), jnp.float32)
    w, b = init_siren_params(kp, in_features, out_features,
                             omega_0=omega_0, is_first=True)

    y = siren_layer(x, w, b, omega_0=omega_0)
    y = jax.block_until_ready(y)

    # reference check in plain JAX (matches the PyTorch forward)
    y_ref = jnp.sin(omega_0 * (x @ w.T + b))
    assert y.shape == (n, out_features)
    assert jnp.allclose(y, y_ref, atol=1e-4, rtol=1e-4)

    print("KERNEL_OK")
</pallas_src>

<mosaic_0001>
module attributes {stable_mosaic.version = 11 : i64} {
  func.func @siren_kernel(%arg0: i32, %arg1: memref<64x16xf32, #tpu.memory_space<vmem>>, %arg2: memref<16x128xf32, #tpu.memory_space<vmem>>, %arg3: memref<1x128xf32, #tpu.memory_space<vmem>>, %arg4: memref<64x128xf32, #tpu.memory_space<vmem>>) attributes {dimension_semantics = [#tpu.dimension_semantics<parallel>], iteration_bounds = array<i64: 1>, scalar_prefetch = 0 : i64, scratch_operands = 0 : i64, tpu.core_type = #tpu.core_type<tc>, window_params = [{transform_indices = @transform_0, window_bounds = array<i64: 64, 16>}, {pipeline_mode = #tpu.pipeline_mode<synchronous>, transform_indices = @transform_1, window_bounds = array<i64: 16, 128>}, {pipeline_mode = #tpu.pipeline_mode<synchronous>, transform_indices = @transform_2, window_bounds = array<i64: 1, 128>}, {transform_indices = @transform_3, window_bounds = array<i64: 64, 128>}]} {
    %c0 = arith.constant 0 : index
    %c0_0 = arith.constant 0 : index
    %0 = vector.load %arg1[%c0, %c0_0] : memref<64x16xf32, #tpu.memory_space<vmem>>, vector<64x16xf32>
    %c0_1 = arith.constant 0 : index
    %c0_2 = arith.constant 0 : index
    %1 = vector.load %arg2[%c0_1, %c0_2] : memref<16x128xf32, #tpu.memory_space<vmem>>, vector<16x128xf32>
    %cst = arith.constant dense<0.000000e+00> : vector<64x128xf32>
    %2 = tpu.matmul %0, %1, %cst {dimension_numbers = #tpu.dot_dimension_numbers<[1], [0], [0], [1], [0, 0, 1, 1], [], []>} : vector<64x16xf32>, vector<16x128xf32>, vector<64x128xf32> -> vector<64x128xf32>
    %c0_3 = arith.constant 0 : index
    %c0_4 = arith.constant 0 : index
    %3 = vector.load %arg3[%c0_3, %c0_4] : memref<1x128xf32, #tpu.memory_space<vmem>>, vector<1x128xf32>
    %4 = vector.broadcast %3 : vector<1x128xf32> to vector<64x128xf32>
    %5 = arith.addf %2, %4 : vector<64x128xf32>
    %6 = math.sin %5 : vector<64x128xf32>
    %c0_5 = arith.constant 0 : index
    %c0_6 = arith.constant 0 : index
    %7 = vector.load %arg4[%c0_5, %c0_6] : memref<64x128xf32, #tpu.memory_space<vmem>>, vector<64x128xf32>
    tpu.vector_store %arg4[%c0_5, %c0_6], %6 {strides = array<i32>} : memref<64x128xf32, #tpu.memory_space<vmem>>, vector<64x128xf32>,
    return
  }
  func.func @transform_0(%arg0: i32) -> (i32, i32) {
    %c0_i32 = arith.constant 0 : i32
    %c0_i32_0 = arith.constant 0 : i32
    return %arg0, %c0_i32 : i32, i32
  }
  func.func @transform_1(%arg0: i32) -> (i32, i32) {
    %c0_i32 = arith.constant 0 : i32
    %c0_i32_0 = arith.constant 0 : i32
    %c0_i32_1 = arith.constant 0 : i32
    return %c0_i32, %c0_i32_0 : i32, i32
  }
  func.func @transform_2(%arg0: i32) -> (i32, i32) {
    %c0_i32 = arith.constant 0 : i32
    %c0_i32_0 = arith.constant 0 : i32
    %c0_i32_1 = arith.constant 0 : i32
    return %c0_i32, %c0_i32_0 : i32, i32
  }
  func.func @transform_3(%arg0: i32) -> (i32, i32) {
    %c0_i32 = arith.constant 0 : i32
    %c0_i32_0 = arith.constant 0 : i32
    return %arg0, %c0_i32 : i32, i32
  }
}

</mosaic_0001>

<llo_original>
// kernel: tpu_custom_call.1
$region0: #{tpu_custom_call.1}
  #allocation0 [shape = 'u32[]', space=smem, size = 0x4, offset = 0x4, fixed_abs, tag = 'smem constant byte address 0x4 - core index']
  #allocation1 [shape = 'u32[144,128]{1,0:T(1,128)}', space=vmem, size = 0x12000, scoped, tag = 'internal scratch']
  %s0 = inlined_call_operand.vmem [shape: f32[64,16], index: 0, kind: input, shape index: {}]
  %s1 = inlined_call_operand.vmem [shape: f32[16,128], index: 1, kind: input, shape index: {}]
  %s2 = inlined_call_operand.vmem [shape: f32[1,128], index: 2, kind: input, shape index: {}]
  %s3 = inlined_call_operand.hbm [shape: f32[64,128], index: 3, kind: output, shape index: {}]
  %s4 = sld [smem:[#allocation0]]
  $region22: #{tpu_custom_call.1} parent=0
    _
  %s6 = ssub.s32 1, %s4
  %s7 = scalar_select 0, %s6, %s4
  $region1: #{tpu_custom_call.1} parent=0
    #allocation2 [shape = 'u8[32768]{0}', space=vmem, size = 0x8000, scoped, tag = 'output window, operand 0, single buffered']
    #allocation3 [shape = 's32[1]{0}', space=sflag, size = 0x4, scoped, tag = 'scoped memory for tpu_custom_call.1']
    %8 = vsyncpa [#allocation3], 0
    // Predicated region
    $region2: #{tpu_custom_call.1} parent=1 // pred_check
      _
    $region3: #{tpu_custom_call.1} parent=1 // pred_check_branch
      %10 = sbr.rel (0) target = $region5
    $region4: #{tpu_custom_call.1} parent=1 // pred_region
      _
    $region5: #{tpu_custom_call.1} parent=1 // pred_fallthru
      _
    // Predicated region
    $region6: #{tpu_custom_call.1} parent=1 // pred_check
      _
    $region7: #{tpu_custom_call.1} parent=1 // pred_check_branch
      %12 = sbr.rel (0) target = $region9
    $region8: #{tpu_custom_call.1} parent=1 // pred_region
      _
    $region9: #{tpu_custom_call.1} parent=1 // pred_fallthru
      _
    // Predicated region
    $region10: #{tpu_custom_call.1} parent=1 // pred_check
      _
    $region11: #{tpu_custom_call.1} parent=1 // pred_check_branch
      %14 = sbr.rel (0) target = $region13
    $region12: #{tpu_custom_call.1} parent=1 // pred_region
      _
    $region13: #{tpu_custom_call.1} parent=1 // pred_fallthru
      _
    %v15 = vld [vmem:[%s0] sm:$0xff]
    %v16 = vld [vmem:[%s0 + $0x8] sm:$0xff]
    %v17 = vld [vmem:[%s0 + $0x10] sm:$0xff]
    %v18 = vld [vmem:[%s0 + $0x18] sm:$0xff]
    %v19 = vld [vmem:[%s0 + $0x20] sm:$0xff]
    %v20 = vld [vmem:[%s0 + $0x28] sm:$0xff]
    %v21 = vld [vmem:[%s0 + $0x30] sm:$0xff]
    %v22 = vld [vmem:[%s0 + $0x38] sm:$0xff]
    %v23 = vld [vmem:[%s1] sm:$0xff]
    %v24 = vld [vmem:[%s1 + $0x8] sm:$0xff]
    %v25 = vld [vmem:[%s2] sm:$0x1]
    %v27 = vlaneseq
    %v28 = vshrl.u32 %v27, 7
    %v29 = vsub.s32 0, %v28
    %v30 = vrot.slane %v25, %v29
    %vm32 = vcmask 130048
    %v34 = vsel %vm32, %v15, 0
    %v37 = vsel %vm32, %v16, 0
    %v40 = vsel %vm32, %v17, 0
    %v43 = vsel %vm32, %v18, 0
    %v46 = vsel %vm32, %v19, 0
    %v49 = vsel %vm32, %v20, 0
    %v52 = vsel %vm32, %v21, 0
    %v55 = vsel %vm32, %v22, 0
    %57 = vmatprep.subr.mxu0 0.0
    %58 = vmatpush1.msra.mxu0 %v23
    %59 = vmatprep.subr.mxu0 0.0
    %60 = vmatpush1.msra.mxu0 %v24
    %61 = vmatprep.subr.mxu0 0.0
    %62 = vmatpush1.msra.mxu0 0.0
    %63 = vmatprep.subr.mxu0 0.0
    %64 = vmatpush1.msra.mxu0 0.0
    %65 = vmatprep.subr.mxu0 0.0
    %66 = vmatpush1.msra.mxu0 0.0
    %67 = vmatprep.subr.mxu0 0.0
    %68 = vmatpush1.msra.mxu0 0.0
    %69 = vmatprep.subr.mxu0 0.0
    %70 = vmatpush1.msra.mxu0 0.0
    %71 = vmatprep.subr.mxu0 0.0
    %72 = vmatpush1.msra.mxu0 0.0
    %73 = vmatprep.subr.mxu0 0.0
    %74 = vmatpush1.msra.mxu0 0.0
    %75 = vmatprep.subr.mxu0 0.0
    %76 = vmatpush1.msra.mxu0 0.0
    %77 = vmatprep.subr.mxu0 0.0
    %78 = vmatpush1.msra.mxu0 0.0
    %79 = vmatprep.subr.mxu0 0.0
    %80 = vmatpush1.msra.mxu0 0.0
    %81 = vmatprep.subr.mxu0 0.0
    %82 = vmatpush1.msra.mxu0 0.0
    %83 = vmatprep.subr.mxu0 0.0
    %84 = vmatpush1.msra.mxu0 0.0
    %85 = vmatprep.subr.mxu0 0.0
    %86 = vmatpush1.msra.mxu0 0.0
    %87 = vmatprep.subr.mxu0 0.0
    %88 = vmatpush1.msra.mxu0 0.0
    %89 = vmatprep.subr.mxu0 0.0
    %90 = vmatpush1.msra.mxu0 0.0
    %91 = vmatprep.subr.mxu0 0.0
    %92 = vmatpush1.msra.mxu0 0.0
    %93 = vmatprep.subr.mxu0 0.0
    %94 = vmatpush1.msra.mxu0 0.0
    %95 = vmatprep.subr.mxu0 0.0
    %96 = vmatpush1.msra.mxu0 0.0
    %97 = vmatprep.subr.mxu0 0.0
    %98 = vmatpush1.msra.mxu0 0.0
    %99 = vmatprep.subr.mxu0 0.0
    %100 = vmatpush1.msra.mxu0 0.0
    %101 = vmatprep.subr.mxu0 0.0
    %102 = vmatpush1.msra.mxu0 0.0
    %103 = vmatprep.subr.mxu0 0.0
    %104 = vmatpush1.msra.mxu0 0.0
    %105 = vmatprep.subr.mxu0 0.0
    %106 = vmatpush1.msra.mxu0 0.0
    %107 = vmatprep.subr.mxu0 0.0
    %108 = vmatpush1.msra.mxu0 0.0
    %109 = vmatprep.subr.mxu0 0.0
    %110 = vmatpush1.msra.mxu0 0.0
    %111 = vmatprep.subr.mxu0 0.0
    %112 = vmatpush1.msra.mxu0 0.0
    %113 = vmatprep.subr.mxu0 0.0
    %114 = vmatpush1.msra.mxu0 0.0
    %115 = vmatprep.subr.mxu0 0.0
    %116 = vmatpush1.msra.mxu0 0.0
    %117 = vmatprep.subr.mxu0 0.0
    %118 = vmatpush1.msra.mxu0 0.0
    %119 = vmatprep.subr.mxu0 0.0
    %120 = vmatpush1.msra.mxu0 0.0
    %121 = vmatprep.mubr.f32.mxu0 0.0
    %122 = vmatmul.mubr.f32.gmra.mrb[0].mxu0 %v34
    %v123 = vpop.f32.mrb[0].mxu0
    %v124 = vadd.f32 %v30, %v123
    %v125 = vpop.f32.mrb[0].mxu0
    %126 = vmatprep.mubr.f32.mxu0 0.0
    %127 = vmatmul.mubr.f32.gmra.mrb[0].mxu0 %v37
    %v128 = vpop.f32.mrb[0].mxu0
    %v129 = vadd.f32 %v30, %v128
    %v130 = vpop.f32.mrb[0].mxu0
    %131 = vmatprep.mubr.f32.mxu0 0.0
    %132 = vmatmul.mubr.f32.gmra.mrb[0].mxu0 %v40
    %v133 = vpop.f32.mrb[0].mxu0
    %v134 = vadd.f32 %v30, %v133
    %v135 = vpop.f32.mrb[0].mxu0
    %136 = vmatprep.mubr.f32.mxu0 0.0
    %137 = vmatmul.mubr.f32.gmra.mrb[0].mxu0 %v43
    %v138 = vpop.f32.mrb[0].mxu0
    %v139 = vadd.f32 %v30, %v138
    %v140 = vpop.f32.mrb[0].mxu0
    %141 = vmatprep.mubr.f32.mxu0 0.0
    %142 = vmatmul.mubr.f32.gmra.mrb[0].mxu0 %v46
    %v143 = vpop.f32.mrb[0].mxu0
    %v144 = vadd.f32 %v30, %v143
    %v145 = vpop.f32.mrb[0].mxu0
    %146 = vmatprep.mubr.f32.mxu0 0.0
    %147 = vmatmul.mubr.f32.gmra.mrb[0].mxu0 %v49
    %v148 = vpop.f32.mrb[0].mxu0
    %v149 = vadd.f32 %v30, %v148
    %v150 = vpop.f32.mrb[0].mxu0
    %151 = vmatprep.mubr.f32.mxu0 0.0
    %152 = vmatmul.mubr.f32.gmra.mrb[0].mxu0 %v52
    %v153 = vpop.f32.mrb[0].mxu0
    %v154 = vadd.f32 %v30, %v153
    %v155 = vpop.f32.mrb[0].mxu0
    %156 = vmatprep.mubr.f32.mxu0 0.0
    %157 = vmatmul.mubr.f32.gmra.mrb[0].mxu0 %v55
    %v158 = vpop.f32.mrb[0].mxu0
    %v159 = vadd.f32 %v30, %v158
    %v160 = vpop.f32.mrb[0].mxu0
    %161 = vdwg.mxu0
    %v162 = vand.u32 2147483647, %v124
    %vm163 = vcmp.le.f32.partialorder %v162, 0.7853982
    %vm164 = vcmp.lt.s32.totalorder %v124, 0
    %v165 = vand.u32 %v124, 2139095040
    %v166 = vshrl.u32 %v165, 23
    %v167 = vsub.s32 %v166, 127
    %v168 = vand.u32 2147483647, %v124
    %v169 = vand.u32 %v168, 8388607
    %v170 = vor.u32 %v169, 8388608
    %v171 = vsub.s32 0, %v170
    %v172 = vadd.s32 %v167, 1
    %vm173 = vcmp.gt.s32.totalorder %v172, 0
    %v174 = vsel %vm173, %v172, 0
    %v175 = vshrl.u32 %v174, 5
    %v176 = vand.u32 %v174, 31
    %v177 = vsub.s32 32, %v176
    %v178 = vshrl.u32 683565275, %v177
    %v179 = vshll.u32 683565275, %v176
    %v180 = vshrl.u32 2475754826, %v177
    %v181 = vor.u32 %v179, %v180
    %v182 = vshll.u32 2475754826, %v176
    %v183 = vshrl.u32 2131351028, %v177
    %v184 = vor.u32 %v182, %v183
    %v185 = vshll.u32 2131351028, %v176
    %v186 = vshrl.u32 2102212464, %v177
    %v187 = vor.u32 %v185, %v186
    %v188 = vshll.u32 2102212464, %v176
    %v189 = vshrl.u32 920167782, %v177
    %v190 = vor.u32 %v188, %v189
    %v191 = vshll.u32 920167782, %v176
    %v192 = vshrl.u32 1326507024, %v177
    %v193 = vor.u32 %v191, %v192
    %vm194 = vcmp.lt.s32.totalorder %v175, 1
    %vm195 = vcmp.lt.s32.totalorder %v175, 2
    %vm196 = vcmp.lt.s32.totalorder %v175, 3
    %vm197 = vcmp.lt.s32.totalorder %v175, 4
    %v198 = vsel %vm194, %v178, %v181
    %v199 = vsel %vm197, %v187, 2102212464
    %v200 = vsel %vm196, %v184, %v199
    %v201 = vsel %vm195, %v198, %v200
    %v202 = vsel %vm194, %v181, %v184
    %v203 = vsel %vm197, %v190, 920167782
    %v204 = vsel %vm196, %v187, %v203
    %v205 = vsel %vm195, %v202, %v204
    %v206 = vsel %vm194, %v184, %v187
    %v207 = vsel %vm197, %v193, 1326507024
    %v208 = vsel %vm196, %v190, %v207
    %v209 = vsel %vm195, %v206, %v208
    %v210 = vshll.u32 %v170, 8
    %v211 = vmul.u32.u64.compose %v210, %v209
    %v212 = vextract.low.u32 %v211
    %v213 = vextract.high.u32 %v211
    %v214 = vmul.u32.u64.compose %v210, %v205
    %v215 = vextract.low.u32 %v214
    %v216 = vextract.high.u32 %v214
    %v217 = vmul.u32 %v210, %v201
    %v218 = vadd.s32 %v213, %v215
    %vm219 = vc.u32 %v213, %v215
    %v220 = vadd.s32 %v216, 1
    %v221 = vsel %vm219, %v220, %v216
    %v222 = vadd.s32 %v217, %v221
    %v223 = vadd.s32 %v222, 536870912
    %v224 = vshrl.u32 %v223, 30
    %v225 = vshll.u32 %v224, 30
    %v226 = vsub.s32 %v222, %v225
    %vm227 = vcmp.lt.s32.totalorder %v226, 0
    %v228 = vsub.s32 0, %v226
    %v229 = vsel %vm227, %v228, %v226
    %v230 = vclz %v229
    %v231 = vsub.s32 %v230, 2
    %vm232 = vcmp.gt.s32.totalorder 0, %v231
    %v233 = vsel %vm232, 0, %v231
    %v234 = vsub.s32 32, %v233
    %v235 = vshll.u32 %v226, %v233
    %v236 = vshrl.u32 %v218, %v234
    %v237 = vor.u32 %v235, %v236
    %v238 = vsub.s32 4294967266, %v233
    %v239 = vadd.s32 %v238, 127
    %v240 = vshll.u32 %v239, 23
    %v241 = vor.u32 4788187, %v240
    %v242 = vand.u32 2147483647, %v241
    %v244 = vcvt.s32.f32 %v237
    %v245 = vmul.f32 %v244, %v242
    %v246 = vxor.u32 %v245, 2147483648
    %v247 = vsel %vm164, %v246, %v245
    %v248 = vsub.s32 4, %v224
    %v249 = vsel %vm164, %v248, %v224
    %v250 = vsel %vm163, %v124, %v247
    %v251 = vsel %vm163, 0, %v249
    %v252 = vcosq.f32.pop %v250
    %v253 = vsinq.f32.pop %v250
    %vm254 = vweird.f32 %v124
    %v255 = vadd.s32 %v251, 3
    %v256 = vand.u32 %v255, 3
    %vm257 = vcmp.lt.s32.totalorder %v256, 2
    %vm258 = vcmp.eq.s32.totalorder %v256, 0
    %v259 = vxor.u32 %v253, 2147483648
    %v260 = vsel %vm258, %v252, %v259
    %vm261 = vcmp.eq.s32.totalorder %v256, 2
    %v262 = vxor.u32 %v252, 2147483648
    %v263 = vsel %vm261, %v262, %v253
    %v264 = vsel %vm257, %v260, %v263
    %v265 = vsel %vm254, nan, %v264
    %v266 = vand.u32 2147483647, %v129
    %vm267 = vcmp.le.f32.partialorder %v266, 0.7853982
    %vm268 = vcmp.lt.s32.totalorder %v129, 0
    %v269 = vand.u32 %v129, 2139095040
    %v270 = vshrl.u32 %v269, 23
    %v271 = vsub.s32 %v270, 127
    %v272 = vand.u32 2147483647, %v129
    %v273 = vand.u32 %v272, 8388607
    %v274 = vor.u32 %v273, 8388608
    %v275 = vsub.s32 0, %v274
    %v276 = vadd.s32 %v271, 1
    %vm277 = vcmp.gt.s32.totalorder %v276, 0
    %v278 = vsel %vm277, %v276, 0
    %v279 = vshrl.u32 %v278, 5
    %v280 = vand.u32 %v278, 31
    %v281 = vsub.s32 32, %v280
    %v282 = vshrl.u32 683565275, %v281
    %v283 = vshll.u32 683565275, %v280
    %v284 = vshrl.u32 2475754826, %v281
    %v285 = vor.u32 %v283, %v284
    %v286 = vshll.u32 2475754826, %v280
    %v287 = vshrl.u32 2131351028, %v281
    %v288 = vor.u32 %v286, %v287
    %v289 = vshll.u32 2131351028, %v280
    %v290 = vshrl.u32 2102212464, %v281
    %v291 = vor.u32 %v289, %v290
    %v292 = vshll.u32 2102212464, %v280
    %v293 = vshrl.u32 920167782, %v281
    %v294 = vor.u32 %v292, %v293
    %v295 = vshll.u32 920167782, %v280
    %v296 = vshrl.u32 1326507024, %v281
    %v297 = vor.u32 %v295, %v296
    %vm298 = vcmp.lt.s32.totalorder %v279, 1
    %vm299 = vcmp.lt.s32.totalorder %v279, 2
    %vm300 = vcmp.lt.s32.totalorder %v279, 3
    %vm301 = vcmp.lt.s32.totalorder %v279, 4
    %v302 = vsel %vm298, %v282, %v285
    %v303 = vsel %vm301, %v291, 2102212464
    %v304 = vsel %vm300, %v288, %v303
    %v305 = vsel %vm299, %v302, %v304
    %v306 = vsel %vm298, %v285, %v288
    %v307 = vsel %vm301, %v294, 920167782
    %v308 = vsel %vm300, %v291, %v307
    %v309 = vsel %vm299, %v306, %v308
    %v310 = vsel %vm298, %v288, %v291
    %v311 = vsel %vm301, %v297, 1326507024
    %v312 = vsel %vm300, %v294, %v311
    %v313 = vsel %vm299, %v310, %v312
    %v314 = vshll.u32 %v274, 8
    %v315 = vmul.u32.u64.compose %v314, %v313
    %v316 = vextract.low.u32 %v315
    %v317 = vextract.high.u32 %v315
    %v318 = vmul.u32.u64.compose %v314, %v309
    %v319 = vextract.low.u32 %v318
    %v320 = vextract.high.u32 %v318
    %v321 = vmul.u32 %v314, %v305
    %v322 = vadd.s32 %v317, %v319
    %vm323 = vc.u32 %v317, %v319
    %v324 = vadd.s32 %v320, 1
    %v325 = vsel %vm323, %v324, %v320
    %v326 = vadd.s32 %v321, %v325
    %v327 = vadd.s32 %v326, 536870912
    %v328 = vshrl.u32 %v327, 30
    %v329 = vshll.u32 %v328, 30
    %v330 = vsub.s32 %v326, %v329
    %vm331 = vcmp.lt.s32.totalorder %v330, 0
    %v332 = vsub.s32 0, %v330
    %v333 = vsel %vm331, %v332, %v330
    %v334 = vclz %v333
    %v335 = vsub.s32 %v334, 2
    %vm336 = vcmp.gt.s32.totalorder 0, %v335
    %v337 = vsel %vm336, 0, %v335
    %v338 = vsub.s32 32, %v337
    %v339 = vshll.u32 %v330, %v337
    %v340 = vshrl.u32 %v322, %v338
    %v341 = vor.u32 %v339, %v340
    %v342 = vsub.s32 4294967266, %v337
    %v343 = vadd.s32 %v342, 127
    %v344 = vshll.u32 %v343, 23
    %v345 = vor.u32 4788187, %v344
    %v346 = vand.u32 2147483647, %v345
    %v348 = vcvt.s32.f32 %v341
    %v349 = vmul.f32 %v348, %v346
    %v350 = vxor.u32 %v349, 2147483648
    %v351 = vsel %vm268, %v350, %v349
    %v352 = vsub.s32 4, %v328
    %v353 = vsel %vm268, %v352, %v328
    %v354 = vsel %vm267, %v129, %v351
    %v355 = vsel %vm267, 0, %v353
    %v356 = vcosq.f32.pop %v354
    %v357 = vsinq.f32.pop %v354
    %vm358 = vweird.f32 %v129
    %v359 = vadd.s32 %v355, 3
    %v360 = vand.u32 %v359, 3
    %vm361 = vcmp.lt.s32.totalorder %v360, 2
    %vm362 = vcmp.eq.s32.totalorder %v360, 0
    %v363 = vxor.u32 %v357, 2147483648
    %v364 = vsel %vm362, %v356, %v363
    %vm365 = vcmp.eq.s32.totalorder %v360, 2
    %v366 = vxor.u32 %v356, 2147483648
    %v367 = vsel %vm365, %v366, %v357
    %v368 = vsel %vm361, %v364, %v367
    %v369 = vsel %vm358, nan, %v368
    %v370 = vand.u32 2147483647, %v134
    %vm371 = vcmp.le.f32.partialorder %v370, 0.7853982
    %vm372 = vcmp.lt.s32.totalorder %v134, 0
    %v373 = vand.u32 %v134, 2139095040
    %v374 = vshrl.u32 %v373, 23
    %v375 = vsub.s32 %v374, 127
    %v376 = vand.u32 2147483647, %v134
    %v377 = vand.u32 %v376, 8388607
    %v378 = vor.u32 %v377, 8388608
    %v379 = vsub.s32 0, %v378
    %v380 = vadd.s32 %v375, 1
    %vm381 = vcmp.gt.s32.totalorder %v380, 0
    %v382 = vsel %vm381, %v380, 0
    %v383 = vshrl.u32 %v382, 5
    %v384 = vand.u32 %v382, 31
    %v385 = vsub.s32 32, %v384
    %v386 = vshrl.u32 683565275, %v385
    %v387 = vshll.u32 683565275, %v384
    %v388 = vshrl.u32 2475754826, %v385
    %v389 = vor.u32 %v387, %v388
    %v390 = vshll.u32 2475754826, %v384
    %v391 = vshrl.u32 2131351028, %v385
    %v392 = vor.u32 %v390, %v391
    %v393 = vshll.u32 2131351028, %v384
    %v394 = vshrl.u32 2102212464, %v385
    %v395 = vor.u32 %v393, %v394
    %v396 = vshll.u32 2102212464, %v384
    %v397 = vshrl.u32 920167782, %v385
    %v398 = vor.u32 %v396, %v397
    %v399 = vshll.u32 920167782, %v384
    %v400 = vshrl.u32 1326507024, %v385
    %v401 = vor.u32 %v399, %v400
    %vm402 = vcmp.lt.s32.totalorder %v383, 1
    %vm403 = vcmp.lt.s32.totalorder %v383, 2
    %vm404 = vcmp.lt.s32.totalorder %v383, 3
    %vm405 = vcmp.lt.s32.totalorder %v383, 4
    %v406 = vsel %vm402, %v386, %v389
    %v407 = vsel %vm405, %v395, 2102212464
    %v408 = vsel %vm404, %v392, %v407
    %v409 = vsel %vm403, %v406, %v408
    %v410 = vsel %vm402, %v389, %v392
    %v411 = vsel %vm405, %v398, 920167782
    %v412 = vsel %vm404, %v395, %v411
    %v413 = vsel %vm403, %v410, %v412
    %v414 = vsel %vm402, %v392, %v395
    %v415 = vsel %vm405, %v401, 1326507024
    %v416 = vsel %vm404, %v398, %v415
    %v417 = vsel %vm403, %v414, %v416
    %v418 = vshll.u32 %v378, 8
    %v419 = vmul.u32.u64.compose %v418, %v417
    %v420 = vextract.low.u32 %v419
    %v421 = vextract.high.u32 %v419
    %v422 = vmul.u32.u64.compose %v418, %v413
    %v423 = vextract.low.u32 %v422
    %v424 = vextract.high.u32 %v422
    %v425 = vmul.u32 %v418, %v409
    %v426 = vadd.s32 %v421, %v423
    %vm427 = vc.u32 %v421, %v423
    %v428 = vadd.s32 %v424, 1
    %v429 = vsel %vm427, %v428, %v424
    %v430 = vadd.s32 %v425, %v429
    %v431 = vadd.s32 %v430, 536870912
    %v432 = vshrl.u32 %v431, 30
    %v433 = vshll.u32 %v432, 30
    %v434 = vsub.s32 %v430, %v433
    %vm435 = vcmp.lt.s32.totalorder %v434, 0
    %v436 = vsub.s32 0, %v434
    %v437 = vsel %vm435, %v436, %v434
    %v438 = vclz %v437
    %v439 = vsub.s32 %v438, 2
    %vm440 = vcmp.gt.s32.totalorder 0, %v439
    %v441 = vsel %vm440, 0, %v439
    %v442 = vsub.s32 32, %v441
    %v443 = vshll.u32 %v434, %v441
    %v444 = vshrl.u32 %v426, %v442
    %v445 = vor.u32 %v443, %v444
    %v446 = vsub.s32 4294967266, %v441
    %v447 = vadd.s32 %v446, 127
    %v448 = vshll.u32 %v447, 23
    %v449 = vor.u32 4788187, %v448
    %v450 = vand.u32 2147483647, %v449
    %v452 = vcvt.s32.f32 %v445
    %v453 = vmul.f32 %v452, %v450
    %v454 = vxor.u32 %v453, 2147483648
    %v455 = vsel %vm372, %v454, %v453
    %v456 = vsub.s32 4, %v432
    %v457 = vsel %vm372, %v456, %v432
    %v458 = vsel %vm371, %v134, %v455
    %v459 = vsel %vm371, 0, %v457
    %v460 = vcosq.f32.pop %v458
    %v461 = vsinq.f32.pop %v458
    %vm462 = vweird.f32 %v134
    %v463 = vadd.s32 %v459, 3
    %v464 = vand.u32 %v463, 3
    %vm465 = vcmp.lt.s32.totalorder %v464, 2
    %vm466 = vcmp.eq.s32.totalorder %v464, 0
    %v467 = vxor.u32 %v461, 2147483648
    %v468 = vsel %vm466, %v460, %v467
    %vm469 = vcmp.eq.s32.totalorder %v464, 2
    %v470 = vxor.u32 %v460, 2147483648
    %v471 = vsel %vm469, %v470, %v461
    %v472 = vsel %vm465, %v468, %v471
    %v473 = vsel %vm462, nan, %v472
    %v474 = vand.u32 2147483647, %v139
    %vm475 = vcmp.le.f32.partialorder %v474, 0.7853982
    %vm476 = vcmp.lt.s32.totalorder %v139, 0
    %v477 = vand.u32 %v139, 2139095040
    %v478 = vshrl.u32 %v477, 23
    %v479 = vsub.s32 %v478, 127
    %v480 = vand.u32 2147483647, %v139
    %v481 = vand.u32 %v480, 8388607
    %v482 = vor.u32 %v481, 8388608
    %v483 = vsub.s32 0, %v482
    %v484 = vadd.s32 %v479, 1
    %vm485 = vcmp.gt.s32.totalorder %v484, 0
    %v486 = vsel %vm485, %v484, 0
    %v487 = vshrl.u32 %v486, 5
    %v488 = vand.u32 %v486, 31
    %v489 = vsub.s32 32, %v488
    %v490 = vshrl.u32 683565275, %v489
    %v491 = vshll.u32 683565275, %v488
    %v492 = vshrl.u32 2475754826, %v489
    %v493 = vor.u32 %v491, %v492
    %v494 = vshll.u32 2475754826, %v488
    %v495 = vshrl.u32 2131351028, %v489
    %v496 = vor.u32 %v494, %v495
    %v497 = vshll.u32 2131351028, %v488
    %v498 = vshrl.u32 2102212464, %v489
    %v499 = vor.u32 %v497, %v498
    %v500 = vshll.u32 2102212464, %v488
    %v501 = vshrl.u32 920167782, %v489
    %v502 = vor.u32 %v500, %v501
    %v503 = vshll.u32 920167782, %v488
    %v504 = vshrl.u32 1326507024, %v489
    %v505 = vor.u32 %v503, %v504
    %vm506 = vcmp.lt.s32.totalorder %v487, 1
    %vm507 = vcmp.lt.s32.totalorder %v487, 2
    %vm508 = vcmp.lt.s32.totalorder %v487, 3
    %vm509 = vcmp.lt.s32.totalorder %v487, 4
    %v510 = vsel %vm506, %v490, %v493
    %v511 = vsel %vm509, %v499, 2102212464
    %v512 = vsel %vm508, %v496, %v511
    %v513 = vsel %vm507, %v510, %v512
    %v514 = vsel %vm506, %v493, %v496
    %v515 = vsel %vm509, %v502, 920167782
    %v516 = vsel %vm508, %v499, %v515
    %v517 = vsel %vm507, %v514, %v516
    %v518 = vsel %vm506, %v496, %v499
    %v519 = vsel %vm509, %v505, 1326507024
    %v520 = vsel %vm508, %v502, %v519
    %v521 = vsel %vm507, %v518, %v520
    %v522 = vshll.u32 %v482, 8
    %v523 = vmul.u32.u64.compose %v522, %v521
    %v524 = vextract.low.u32 %v523
    %v525 = vextract.high.u32 %v523
    %v526 = vmul.u32.u64.compose %v522, %v517
    %v527 = vextract.low.u32 %v526
    %v528 = vextract.high.u32 %v526
    %v529 = vmul.u32 %v522, %v513
    %v530 = vadd.s32 %v525, %v527
    %vm531 = vc.u32 %v525, %v527
    %v532 = vadd.s32 %v528, 1
    %v533 = vsel %vm531, %v532, %v528
    %v534 = vadd.s32 %v529, %v533
    %v535 = vadd.s32 %v534, 536870912
    %v536 = vshrl.u32 %v535, 30
    %v537 = vshll.u32 %v536, 30
    %v538 = vsub.s32 %v534, %v537
    %vm539 = vcmp.lt.s32.totalorder %v538, 0
    %v540 = vsub.s32 0, %v538
    %v541 = vsel %vm539, %v540, %v538
    %v542 = vclz %v541
    %v543 = vsub.s32 %v542, 2
    %vm544 = vcmp.gt.s32.totalorder 0, %v543
    %v545 = vsel %vm544, 0, %v543
    %v546 = vsub.s32 32, %v545
    %v547 = vshll.u32 %v538, %v545
    %v548 = vshrl.u32 %v530, %v546
    %v549 = vor.u32 %v547, %v548
    %v550 = vsub.s32 4294967266, %v545
    %v551 = vadd.s32 %v550, 127
    %v552 = vshll.u32 %v551, 23
    %v553 = vor.u32 4788187, %v552
    %v554 = vand.u32 2147483647, %v553
    %v556 = vcvt.s32.f32 %v549
    %v557 = vmul.f32 %v556, %v554
    %v558 = vxor.u32 %v557, 2147483648
    %v559 = vsel %vm476, %v558, %v557
    %v560 = vsub.s32 4, %v536
    %v561 = vsel %vm476, %v560, %v536
    %v562 = vsel %vm475, %v139, %v559
    %v563 = vsel %vm475, 0, %v561
    %v564 = vcosq.f32.pop %v562
    %v565 = vsinq.f32.pop %v562
    %vm566 = vweird.f32 %v139
    %v567 = vadd.s32 %v563, 3
    %v568 = vand.u32 %v567, 3
    %vm569 = vcmp.lt.s32.totalorder %v568, 2
    %vm570 = vcmp.eq.s32.totalorder %v568, 0
    %v571 = vxor.u32 %v565, 2147483648
    %v572 = vsel %vm570, %v564, %v571
    %vm573 = vcmp.eq.s32.totalorder %v568, 2
    %v574 = vxor.u32 %v564, 2147483648
    %v575 = vsel %vm573, %v574, %v565
    %v576 = vsel %vm569, %v572, %v575
    %v577 = vsel %vm566, nan, %v576
    %v578 = vand.u32 2147483647, %v144
    %vm579 = vcmp.le.f32.partialorder %v578, 0.7853982
    %vm580 = vcmp.lt.s32.totalorder %v144, 0
    %v581 = vand.u32 %v144, 2139095040
    %v582 = vshrl.u32 %v581, 23
    %v583 = vsub.s32 %v582, 127
    %v584 = vand.u32 2147483647, %v144
    %v585 = vand.u32 %v584, 8388607
    %v586 = vor.u32 %v585, 8388608
    %v587 = vsub.s32 0, %v586
    %v588 = vadd.s32 %v583, 1
    %vm589 = vcmp.gt.s32.totalorder %v588, 0
    %v590 = vsel %vm589, %v588, 0
    %v591 = vshrl.u32 %v590, 5
    %v592 = vand.u32 %v590, 31
    %v593 = vsub.s32 32, %v592
    %v594 = vshrl.u32 683565275, %v593
    %v595 = vshll.u32 683565275, %v592
    %v596 = vshrl.u32 2475754826, %v593
    %v597 = vor.u32 %v595, %v596
    %v598 = vshll.u32 2475754826, %v592
    %v599 = vshrl.u32 2131351028, %v593
    %v600 = vor.u32 %v598, %v599
    %v601 = vshll.u32 2131351028, %v592
    %v602 = vshrl.u32 2102212464, %v593
    %v603 = vor.u32 %v601, %v602
    %v604 = vshll.u32 2102212464, %v592
    %v605 = vshrl.u32 920167782, %v593
    %v606 = vor.u32 %v604, %v605
    %v607 = vshll.u32 920167782, %v592
    %v608 = vshrl.u32 1326507024, %v593
    %v609 = vor.u32 %v607, %v608
    %vm610 = vcmp.lt.s32.totalorder %v591, 1
    %vm611 = vcmp.lt.s32.totalorder %v591, 2
    %vm612 = vcmp.lt.s32.totalorder %v591, 3
    %vm613 = vcmp.lt.s32.totalorder %v591, 4
    %v614 = vsel %vm610, %v594, %v597
    %v615 = vsel %vm613, %v603, 2102212464
    %v616 = vsel %vm612, %v600, %v615
    %v617 = vsel %vm611, %v614, %v616
    %v618 = vsel %vm610, %v597, %v600
    %v619 = vsel %vm613, %v606, 920167782
    %v620 = vsel %vm612, %v603, %v619
    %v621 = vsel %vm611, %v618, %v620
    %v622 = vsel %vm610, %v600, %v603
    %v623 = vsel %vm613, %v609, 1326507024
    %v624 = vsel %vm612, %v606, %v623
    %v625 = vsel %vm611, %v622, %v624
    %v626 = vshll.u32 %v586, 8
    %v627 = vmul.u32.u64.compose %v626, %v625
    %v628 = vextract.low.u32 %v627
    %v629 = vextract.high.u32 %v627
    %v630 = vmul.u32.u64.compose %v626, %v621
    %v631 = vextract.low.u32 %v630
    %v632 = vextract.high.u32 %v630
    %v633 = vmul.u32 %v626, %v617
    %v634 = vadd.s32 %v629, %v631
    %vm635 = vc.u32 %v629, %v631
    %v636 = vadd.s32 %v632, 1
    %v637 = vsel %vm635, %v636, %v632
    %v638 = vadd.s32 %v633, %v637
    %v639 = vadd.s32 %v638, 536870912
    %v640 = vshrl.u32 %v639, 30
    %v641 = vshll.u32 %v640, 30
    %v642 = vsub.s32 %v638, %v641
    %vm643 = vcmp.lt.s32.totalorder %v642, 0
    %v644 = vsub.s32 0, %v642
    %v645 = vsel %vm643, %v644, %v642
    %v646 = vclz %v645
    %v647 = vsub.s32 %v646, 2
    %vm648 = vcmp.gt.s32.totalorder 0, %v647
    %v649 = vsel %vm648, 0, %v647
    %v650 = vsub.s32 32, %v649
    %v651 = vshll.u32 %v642, %v649
    %v652 = vshrl.u32 %v634, %v650
    %v653 = vor.u32 %v651, %v652
    %v654 = vsub.s32 4294967266, %v649
    %v655 = vadd.s32 %v654, 127
    %v656 = vshll.u32 %v655, 23
    %v657 = vor.u32 4788187, %v656
    %v658 = vand.u32 2147483647, %v657
    %v660 = vcvt.s32.f32 %v653
    %v661 = vmul.f32 %v660, %v658
    %v662 = vxor.u32 %v661, 2147483648
    %v663 = vsel %vm580, %v662, %v661
    %v664 = vsub.s32 4, %v640
    %v665 = vsel %vm580, %v664, %v640
    %v666 = vsel %vm579, %v144, %v663
    %v667 = vsel %vm579, 0, %v665
    %v668 = vcosq.f32.pop %v666
    %v669 = vsinq.f32.pop %v666
    %vm670 = vweird.f32 %v144
    %v671 = vadd.s32 %v667, 3
    %v672 = vand.u32 %v671, 3
    %vm673 = vcmp.lt.s32.totalorder %v672, 2
    %vm674 = vcmp.eq.s32.totalorder %v672, 0
    %v675 = vxor.u32 %v669, 2147483648
    %v676 = vsel %vm674, %v668, %v675
    %vm677 = vcmp.eq.s32.totalorder %v672, 2
    %v678 = vxor.u32 %v668, 2147483648
    %v679 = vsel %vm677, %v678, %v669
    %v680 = vsel %vm673, %v676, %v679
    %v681 = vsel %vm670, nan, %v680
    %v682 = vand.u32 2147483647, %v149
    %vm683 = vcmp.le.f32.partialorder %v682, 0.7853982
    %vm684 = vcmp.lt.s32.totalorder %v149, 0
    %v685 = vand.u32 %v149, 2139095040
    %v686 = vshrl.u32 %v685, 23
    %v687 = vsub.s32 %v686, 127
    %v688 = vand.u32 2147483647, %v149
    %v689 = vand.u32 %v688, 8388607
    %v690 = vor.u32 %v689, 8388608
    %v691 = vsub.s32 0, %v690
    %v692 = vadd.s32 %v687, 1
    %vm693 = vcmp.gt.s32.totalorder %v692, 0
    %v694 = vsel %vm693, %v692, 0
    %v695 = vshrl.u32 %v694, 5
    %v696 = vand.u32 %v694, 31
    %v697 = vsub.s32 32, %v696
    %v698 = vshrl.u32 683565275, %v697
    %v699 = vshll.u32 683565275, %v696
    %v700 = vshrl.u32 2475754826, %v697
    %v701 = vor.u32 %v699, %v700
    %v702 = vshll.u32 2475754826, %v696
    %v703 = vshrl.u32 2131351028, %v697
    %v704 = vor.u32 %v702, %v703
    %v705 = vshll.u32 2131351028, %v696
    %v706 = vshrl.u32 2102212464, %v697
    %v707 = vor.u32 %v705, %v706
    %v708 = vshll.u32 2102212464, %v696
    %v709 = vshrl.u32 920167782, %v697
    %v710 = vor.u32 %v708, %v709
    %v711 = vshll.u32 920167782, %v696
    %v712 = vshrl.u32 1326507024, %v697
    %v713 = vor.u32 %v711, %v712
    %vm714 = vcmp.lt.s32.totalorder %v695, 1
    %vm715 = vcmp.lt.s32.totalorder %v695, 2
    %vm716 = vcmp.lt.s32.totalorder %v695, 3
    %vm717 = vcmp.lt.s32.totalorder %v695, 4
    %v718 = vsel %vm714, %v698, %v701
    %v719 = vsel %vm717, %v707, 2102212464
    %v720 = vsel %vm716, %v704, %v719
    %v721 = vsel %vm715, %v718, %v720
    %v722 = vsel %vm714, %v701, %v704
    %v723 = vsel %vm717, %v710, 920167782
    %v724 = vsel %vm716, %v707, %v723
    %v725 = vsel %vm715, %v722, %v724
    %v726 = vsel %vm714, %v704, %v707
    %v727 = vsel %vm717, %v713, 1326507024
    %v728 = vsel %vm716, %v710, %v727
    %v729 = vsel %vm715, %v726, %v728
    %v730 = vshll.u32 %v690, 8
    %v731 = vmul.u32.u64.compose %v730, %v729
    %v732 = vextract.low.u32 %v731
    %v733 = vextract.high.u32 %v731
    %v734 = vmul.u32.u64.compose %v730, %v725
    %v735 = vextract.low.u32 %v734
    %v736 = vextract.high.u32 %v734
    %v737 = vmul.u32 %v730, %v721
    %v738 = vadd.s32 %v733, %v735
    %vm739 = vc.u32 %v733, %v735
    %v740 = vadd.s32 %v736, 1
    %v741 = vsel %vm739, %v740, %v736
    %v742 = vadd.s32 %v737, %v741
    %v743 = vadd.s32 %v742, 536870912
    %v744 = vshrl.u32 %v743, 30
    %v745 = vshll.u32 %v744, 30
    %v746 = vsub.s32 %v742, %v745
    %vm747 = vcmp.lt.s32.totalorder %v746, 0
    %v748 = vsub.s32 0, %v746
    %v749 = vsel %vm747, %v748, %v746
    %v750 = vclz %v749
    %v751 = vsub.s32 %v750, 2
    %vm752 = vcmp.gt.s32.totalorder 0, %v751
    %v753 = vsel %vm752, 0, %v751
    %v754 = vsub.s32 32, %v753
    %v755 = vshll.u32 %v746, %v753
    %v756 = vshrl.u32 %v738, %v754
    %v757 = vor.u32 %v755, %v756
    %v758 = vsub.s32 4294967266, %v753
    %v759 = vadd.s32 %v758, 127
    %v760 = vshll.u32 %v759, 23
    %v761 = vor.u32 4788187, %v760
    %v762 = vand.u32 2147483647, %v761
    %v764 = vcvt.s32.f32 %v757
    %v765 = vmul.f32 %v764, %v762
    %v766 = vxor.u32 %v765, 2147483648
    %v767 = vsel %vm684, %v766, %v765
    %v768 = vsub.s32 4, %v744
    %v769 = vsel %vm684, %v768, %v744
    %v770 = vsel %vm683, %v149, %v767
    %v771 = vsel %vm683, 0, %v769
    %v772 = vcosq.f32.pop %v770
    %v773 = vsinq.f32.pop %v770
    %vm774 = vweird.f32 %v149
    %v775 = vadd.s32 %v771, 3
    %v776 = vand.u32 %v775, 3
    %vm777 = vcmp.lt.s32.totalorder %v776, 2
    %vm778 = vcmp.eq.s32.totalorder %v776, 0
    %v779 = vxor.u32 %v773, 2147483648
    %v780 = vsel %vm778, %v772, %v779
    %vm781 = vcmp.eq.s32.totalorder %v776, 2
    %v782 = vxor.u32 %v772, 2147483648
    %v783 = vsel %vm781, %v782, %v773
    %v784 = vsel %vm777, %v780, %v783
    %v785 = vsel %vm774, nan, %v784
    %v786 = vand.u32 2147483647, %v154
    %vm787 = vcmp.le.f32.partialorder %v786, 0.7853982
    %vm788 = vcmp.lt.s32.totalorder %v154, 0
    %v789 = vand.u32 %v154, 2139095040
    %v790 = vshrl.u32 %v789, 23
    %v791 = vsub.s32 %v790, 127
    %v792 = vand.u32 2147483647, %v154
    %v793 = vand.u32 %v792, 8388607
    %v794 = vor.u32 %v793, 8388608
    %v795 = vsub.s32 0, %v794
    %v796 = vadd.s32 %v791, 1
    %vm797 = vcmp.gt.s32.totalorder %v796, 0
    %v798 = vsel %vm797, %v796, 0
    %v799 = vshrl.u32 %v798, 5
    %v800 = vand.u32 %v798, 31
    %v801 = vsub.s32 32, %v800
    %v802 = vshrl.u32 683565275, %v801
    %v803 = vshll.u32 683565275, %v800
    %v804 = vshrl.u32 2475754826, %v801
    %v805 = vor.u32 %v803, %v804
    %v806 = vshll.u32 2475754826, %v800
    %v807 = vshrl.u32 2131351028, %v801
    %v808 = vor.u32 %v806, %v807
    %v809 = vshll.u32 2131351028, %v800
    %v810 = vshrl.u32 2102212464, %v801
    %v811 = vor.u32 %v809, %v810
    %v812 = vshll.u32 2102212464, %v800
    %v813 = vshrl.u32 920167782, %v801
    %v814 = vor.u32 %v812, %v813
    %v815 = vshll.u32 920167782, %v800
    %v816 = vshrl.u32 1326507024, %v801
    %v817 = vor.u32 %v815, %v816
    %vm818 = vcmp.lt.s32.totalorder %v799, 1
    %vm819 = vcmp.lt.s32.totalorder %v799, 2
    %vm820 = vcmp.lt.s32.totalorder %v799, 3
    %vm821 = vcmp.lt.s32.totalorder %v799, 4
    %v822 = vsel %vm818, %v802, %v805
    %v823 = vsel %vm821, %v811, 2102212464
    %v824 = vsel %vm820, %v808, %v823
    %v825 = vsel %vm819, %v822, %v824
    %v826 = vsel %vm818, %v805, %v808
    %v827 = vsel %vm821, %v814, 920167782
    %v828 = vsel %vm820, %v811, %v827
    %v829 = vsel %vm819, %v826, %v828
    %v830 = vsel %vm818, %v808, %v811
    %v831 = vsel %vm821, %v817, 1326507024
    %v832 = vsel %vm820, %v814, %v831
    %v833 = vsel %vm819, %v830, %v832
    %v834 = vshll.u32 %v794, 8
    %v835 = vmul.u32.u64.compose %v834, %v833
    %v836 = vextract.low.u32 %v835
    %v837 = vextract.high.u32 %v835
    %v838 = vmul.u32.u64.compose %v834, %v829
    %v839 = vextract.low.u32 %v838
    %v840 = vextract.high.u32 %v838
    %v841 = vmul.u32 %v834, %v825
    %v842 = vadd.s32 %v837, %v839
    %vm843 = vc.u32 %v837, %v839
    %v844 = vadd.s32 %v840, 1
    %v845 = vsel %vm843, %v844, %v840
    %v846 = vadd.s32 %v841, %v845
    %v847 = vadd.s32 %v846, 536870912
    %v848 = vshrl.u32 %v847, 30
    %v849 = vshll.u32 %v848, 30
    %v850 = vsub.s32 %v846, %v849
    %vm851 = vcmp.lt.s32.totalorder %v850, 0
    %v852 = vsub.s32 0, %v850
    %v853 = vsel %vm851, %v852, %v850
    %v854 = vclz %v853
    %v855 = vsub.s32 %v854, 2
    %vm856 = vcmp.gt.s32.totalorder 0, %v855
    %v857 = vsel %vm856, 0, %v855
    %v858 = vsub.s32 32, %v857
    %v859 = vshll.u32 %v850, %v857
    %v860 = vshrl.u32 %v842, %v858
    %v861 = vor.u32 %v859, %v860
    %v862 = vsub.s32 4294967266, %v857
    %v863 = vadd.s32 %v862, 127
    %v864 = vshll.u32 %v863, 23
    %v865 = vor.u32 4788187, %v864
    %v866 = vand.u32 2147483647, %v865
    %v868 = vcvt.s32.f32 %v861
    %v869 = vmul.f32 %v868, %v866
    %v870 = vxor.u32 %v869, 2147483648
    %v871 = vsel %vm788, %v870, %v869
    %v872 = vsub.s32 4, %v848
    %v873 = vsel %vm788, %v872, %v848
    %v874 = vsel %vm787, %v154, %v871
    %v875 = vsel %vm787, 0, %v873
    %v876 = vcosq.f32.pop %v874
    %v877 = vsinq.f32.pop %v874
    %vm878 = vweird.f32 %v154
    %v879 = vadd.s32 %v875, 3
    %v880 = vand.u32 %v879, 3
    %vm881 = vcmp.lt.s32.totalorder %v880, 2
    %vm882 = vcmp.eq.s32.totalorder %v880, 0
    %v883 = vxor.u32 %v877, 2147483648
    %v884 = vsel %vm882, %v876, %v883
    %vm885 = vcmp.eq.s32.totalorder %v880, 2
    %v886 = vxor.u32 %v876, 2147483648
    %v887 = vsel %vm885, %v886, %v877
    %v888 = vsel %vm881, %v884, %v887
    %v889 = vsel %vm878, nan, %v888
    %v890 = vand.u32 2147483647, %v159
    %vm891 = vcmp.le.f32.partialorder %v890, 0.7853982
    %vm892 = vcmp.lt.s32.totalorder %v159, 0
    %v893 = vand.u32 %v159, 2139095040
    %v894 = vshrl.u32 %v893, 23
    %v895 = vsub.s32 %v894, 127
    %v896 = vand.u32 2147483647, %v159
    %v897 = vand.u32 %v896, 8388607
    %v898 = vor.u32 %v897, 8388608
    %v899 = vsub.s32 0, %v898
    %v900 = vadd.s32 %v895, 1
    %vm901 = vcmp.gt.s32.totalorder %v900, 0
    %v902 = vsel %vm901, %v900, 0
    %v903 = vshrl.u32 %v902, 5
    %v904 = vand.u32 %v902, 31
    %v905 = vsub.s32 32, %v904
    %v906 = vshrl.u32 683565275, %v905
    %v907 = vshll.u32 683565275, %v904
    %v908 = vshrl.u32 2475754826, %v905
    %v909 = vor.u32 %v907, %v908
    %v910 = vshll.u32 2475754826, %v904
    %v911 = vshrl.u32 2131351028, %v905
    %v912 = vor.u32 %v910, %v911
    %v913 = vshll.u32 2131351028, %v904
    %v914 = vshrl.u32 2102212464, %v905
    %v915 = vor.u32 %v913, %v914
    %v916 = vshll.u32 2102212464, %v904
    %v917 = vshrl.u32 920167782, %v905
    %v918 = vor.u32 %v916, %v917
    %v919 = vshll.u32 920167782, %v904
    %v920 = vshrl.u32 1326507024, %v905
    %v921 = vor.u32 %v919, %v920
    %vm922 = vcmp.lt.s32.totalorder %v903, 1
    %vm923 = vcmp.lt.s32.totalorder %v903, 2
    %vm924 = vcmp.lt.s32.totalorder %v903, 3
    %vm925 = vcmp.lt.s32.totalorder %v903, 4
    %v926 = vsel %vm922, %v906, %v909
    %v927 = vsel %vm925, %v915, 2102212464
    %v928 = vsel %vm924, %v912, %v927
    %v929 = vsel %vm923, %v926, %v928
    %v930 = vsel %vm922, %v909, %v912
    %v931 = vsel %vm925, %v918, 920167782
    %v932 = vsel %vm924, %v915, %v931
    %v933 = vsel %vm923, %v930, %v932
    %v934 = vsel %vm922, %v912, %v915
    %v935 = vsel %vm925, %v921, 1326507024
    %v936 = vsel %vm924, %v918, %v935
    %v937 = vsel %vm923, %v934, %v936
    %v938 = vshll.u32 %v898, 8
    %v939 = vmul.u32.u64.compose %v938, %v937
    %v940 = vextract.low.u32 %v939
    %v941 = vextract.high.u32 %v939
    %v942 = vmul.u32.u64.compose %v938, %v933
    %v943 = vextract.low.u32 %v942
    %v944 = vextract.high.u32 %v942
    %v945 = vmul.u32 %v938, %v929
    %v946 = vadd.s32 %v941, %v943
    %vm947 = vc.u32 %v941, %v943
    %v948 = vadd.s32 %v944, 1
    %v949 = vsel %vm947, %v948, %v944
    %v950 = vadd.s32 %v945, %v949
    %v951 = vadd.s32 %v950, 536870912
    %v952 = vshrl.u32 %v951, 30
    %v953 = vshll.u32 %v952, 30
    %v954 = vsub.s32 %v950, %v953
    %vm955 = vcmp.lt.s32.totalorder %v954, 0
    %v956 = vsub.s32 0, %v954
    %v957 = vsel %vm955, %v956, %v954
    %v958 = vclz %v957
    %v959 = vsub.s32 %v958, 2
    %vm960 = vcmp.gt.s32.totalorder 0, %v959
    %v961 = vsel %vm960, 0, %v959
    %v962 = vsub.s32 32, %v961
    %v963 = vshll.u32 %v954, %v961
    %v964 = vshrl.u32 %v946, %v962
    %v965 = vor.u32 %v963, %v964
    %v966 = vsub.s32 4294967266, %v961
    %v967 = vadd.s32 %v966, 127
    %v968 = vshll.u32 %v967, 23
    %v969 = vor.u32 4788187, %v968
    %v970 = vand.u32 2147483647, %v969
    %v972 = vcvt.s32.f32 %v965
    %v973 = vmul.f32 %v972, %v970
    %v974 = vxor.u32 %v973, 2147483648
    %v975 = vsel %vm892, %v974, %v973
    %v976 = vsub.s32 4, %v952
    %v977 = vsel %vm892, %v976, %v952
    %v978 = vsel %vm891, %v159, %v975
    %v979 = vsel %vm891, 0, %v977
    %v980 = vcosq.f32.pop %v978
    %v981 = vsinq.f32.pop %v978
    %vm982 = vweird.f32 %v159
    %v983 = vadd.s32 %v979, 3
    %v984 = vand.u32 %v983, 3
    %vm985 = vcmp.lt.s32.totalorder %v984, 2
    %vm986 = vcmp.eq.s32.totalorder %v984, 0
    %v987 = vxor.u32 %v981, 2147483648
    %v988 = vsel %vm986, %v980, %v987
    %vm989 = vcmp.eq.s32.totalorder %v984, 2
    %v990 = vxor.u32 %v980, 2147483648
    %v991 = vsel %vm989, %v990, %v981
    %v992 = vsel %vm985, %v988, %v991
    %v993 = vsel %vm982, nan, %v992
    %994 = vst [vmem:[#allocation2] sm:$0xff] %v265
    %995 = vst [vmem:[#allocation2 + $0x8] sm:$0xff] %v369
    %996 = vst [vmem:[#allocation2 + $0x10] sm:$0xff] %v473
    %997 = vst [vmem:[#allocation2 + $0x18] sm:$0xff] %v577
    %998 = vst [vmem:[#allocation2 + $0x20] sm:$0xff] %v681
    %999 = vst [vmem:[#allocation2 + $0x28] sm:$0xff] %v785
    %1000 = vst [vmem:[#allocation2 + $0x30] sm:$0xff] %v889
    %1001 = vst [vmem:[#allocation2 + $0x38] sm:$0xff] %v993
    // Predicated region
    $region14: #{tpu_custom_call.1} parent=1 // pred_check
      _
    $region15: #{tpu_custom_call.1} parent=1 // pred_check_branch
      %1003 = sbr.rel (0) target = $region17
    $region16: #{tpu_custom_call.1} parent=1 // pred_region
      %s1005 = ssub.s32 1024, 1024
      %1006 = vsyncadd [#allocation3], %s1005
      %s1007 = sshll.u32 [#allocation2], 4
      %s1008 = int_to_ptr.vmem [resolvable:$true] %s1007
      %1013 = dma.vmem_to_hbm [thread:$0]  %s1008, 1024, %s3, [#allocation3], 128, 128, 8
    $region17: #{tpu_custom_call.1} parent=1 // pred_fallthru
      _
    // Predicated region
    $region18: #{tpu_custom_call.1} parent=1 // pred_check
      _
    $region19: #{tpu_custom_call.1} parent=1 // pred_check_branch
      %1015 = sbr.rel (0) target = $region21
    $region20: #{tpu_custom_call.1} parent=1 // pred_region
      %1016 = dma.done [#allocation3], 1024
    $region21: #{tpu_custom_call.1} parent=1 // pred_fallthru
      _
    %1017 = vsyncpa [#allocation3], 1

</llo_original>
